<compile_context>
chip_gen: v5e
topology: v5e:2x2
jax: 0.10.0
libtpu: 0.0.40
codegen_flags: <defaults>
</compile_context>

<pallas_src>
import functools

import jax
import jax.numpy as jnp
from jax import lax
from jax.experimental import pallas as pl
from jax.experimental.pallas import tpu as pltpu

EPS = 1e-5
MOMENTUM = 0.9


def _vmem_limit_bytes():
    """Per-generation scoped-VMEM limit to request (leave physical headroom)."""
    kind = ""
    try:
        kind = jax.devices()[0].device_kind.lower()
    except Exception:
        pass
    if "v7" in kind:
        return 40 * 1024 * 1024      # v7x: 64 MiB physical per TensorCore
    if "v4" in kind or "v5" in kind or "v6" in kind:
        return 96 * 1024 * 1024      # 128 MiB physical VMEM
    return 40 * 1024 * 1024          # unknown generation: stay conservative


def _choose_tiles(N, C, HW, itemsize, tile_budget):
    """Pick (Nb, hw_t): batch elements per grid step and HW (lane) tile.

    Budget-aware: bytes-per-block = Nb*C*hw_t*itemsize <= tile_budget.
    Prefers the full HW extent (one contiguous DMA per block) and packs batch
    elements so each grid step moves MiB-scale data (small-layer regime)."""
    row_bytes = C * HW * itemsize
    if row_bytes <= tile_budget:
        nb = 1
        for d in range(min(N, max(1, tile_budget // row_bytes)), 0, -1):
            if N % d == 0:
                nb = d
                break
        return nb, HW
    # Must split HW: largest multiple-of-128 divisor that fits the budget
    # (keeps blocks lane-dense and satisfies the (8,128) rule).
    best = 0
    t = 128
    while t <= HW:
        if HW % t == 0 and C * t * itemsize <= tile_budget:
            best = t
        t += 128
    if best:
        return 1, best
    # TODO(synk): no lane-dense divisor fits (e.g. odd HW with huge C); fall
    #             back to the full HW extent, which may exceed the VMEM target.
    return 1, HW


# ---------------------------------------------------------------------------
# Fused path: x resident in VMEM -> one HBM read + one HBM write of x.
# ---------------------------------------------------------------------------
def _fused_bn_kernel(x_hbm, g_ref, b_ref, y_hbm, mean_ref, var_ref, xbuf,
                     *, n_batch, inv_count, eps, out_dtype):
    # One contiguous DMA of the whole activation into VMEM.
    # TODO(synk): overlap this inbound DMA with the stats loop via a chunked
    #             double-buffered copy if the serialized DMA ever shows up.
    pltpu.sync_copy(x_hbm, xbuf)

    c = xbuf.shape[1]

    def stats_body(i, carry):
        s, ss = carry
        xi = xbuf[i].astype(jnp.float32)                    # (C, HW)
        s = s + jnp.sum(xi, axis=1, keepdims=True)          # (C, 1)
        ss = ss + jnp.sum(xi * xi, axis=1, keepdims=True)   # (C, 1)
        return s, ss

    zeros = jnp.zeros((c, 1), jnp.float32)
    s, ss = lax.fori_loop(0, n_batch, stats_body, (zeros, zeros))

    mean = s * inv_count
    # TODO(synk): one-pass E[x^2]-mean^2 can lose precision for large-mean
    #             activations; f32 per-row partial sums are adequate for
    #             BN-sized counts.
    var = ss * inv_count - mean * mean
    mean_ref[...] = mean
    var_ref[...] = var

    inv_std = lax.rsqrt(var + eps)                          # (C, 1), EUP
    scale = g_ref[...] * inv_std
    shift = b_ref[...] - mean * scale

    def norm_body(i, carry):
        xi = xbuf[i].astype(jnp.float32)                    # (C, HW)
        xbuf[i] = (xi * scale + shift).astype(out_dtype)    # reuse xbuf as y
        return carry

    lax.fori_loop(0, n_batch, norm_body, 0)

    # One contiguous DMA of the normalized activation back to HBM.
    pltpu.sync_copy(xbuf, y_hbm)


# ---------------------------------------------------------------------------
# Tiled fallback: two pipelined passes.
# ---------------------------------------------------------------------------
def _stats_kernel(x_ref, sum_ref, sumsq_ref, *, lane_fold):
    """Per-N-block lane-wide partial sum / sum-of-squares accumulators."""
    t = pl.program_id(1)

    @pl.when(t == 0)
    def _init():
        sum_ref[...] = jnp.zeros_like(sum_ref)
        sumsq_ref[...] = jnp.zeros_like(sumsq_ref)

    x = x_ref[...].astype(jnp.float32)          # (Nb, C, hw_t)
    xs = jnp.sum(x, axis=0)                     # (C, hw_t) — VPU adds only
    xq = jnp.sum(x * x, axis=0)                 # (C, hw_t)

    if lane_fold:
        # Fold hw_t lanes into the 128-lane accumulator with aligned lane
        # slices (pure VPU adds; the final 128->1 XLU reduce happens once, on
        # a tiny array, in the wrapper).
        w = sum_ref.shape[-1]                   # 128
        acc_s = sum_ref[...]
        acc_q = sumsq_ref[...]
        for j in range(xs.shape[-1] // w):
            acc_s = acc_s + xs[:, j * w:(j + 1) * w]
            acc_q = acc_q + xq[:, j * w:(j + 1) * w]
        sum_ref[...] = acc_s
        sumsq_ref[...] = acc_q
    else:                                        # accumulator width == hw_t
        sum_ref[...] += xs
        sumsq_ref[...] += xq


def _normalize_kernel(scale_ref, shift_ref, x_ref, y_ref):
    """y = x * scale + shift with per-channel (C,1) scale/shift broadcast."""
    x = x_ref[...].astype(jnp.float32)          # (Nb, C, hw_t)
    y_ref[...] = (x * scale_ref[...] + shift_ref[...]).astype(y_ref.dtype)


# ---------------------------------------------------------------------------
# Wrapper.
# ---------------------------------------------------------------------------
def batch_normal_pallas(x, gamma, beta, moving_mean, moving_var,
                        eps=EPS, momentum=MOMENTUM, force_tiled=False):
    """Training-mode BN for 4-D x (the GoogleNet path).

    x: (N, C, H, W); gamma/beta/moving_*: (1, C, 1, 1).
    Returns (y, new_moving_mean, new_moving_var)."""
    # TODO(synk): the num_dims=2 branch and the eval (torch.no_grad) branch of
    #             batch_normal are not implemented; only the 4-D training path.
    N, C, H, W = x.shape
    HW = H * W
    x3 = x.reshape(N, C, HW)                    # contiguous reshape, no transpose
    itemsize = x.dtype.itemsize
    inv_count = 1.0 / float(N * HW)

    g = gamma.reshape(C, 1).astype(jnp.float32)
    b = beta.reshape(C, 1).astype(jnp.float32)

    vmem_limit = _vmem_limit_bytes()
    cparams = dict(vmem_limit_bytes=vmem_limit)

    x_bytes = N * C * HW * itemsize
    fused_need = x_bytes + 5 * C * HW * 4       # resident x + f32 row temporaries

    if not force_tiled and fused_need <= (3 * vmem_limit) // 4:
        # ---- fused path: 1 HBM read + 1 HBM write of x ----
        y3, mean, var = pl.pallas_call(
            functools.partial(_fused_bn_kernel, n_batch=N,
                              inv_count=inv_count, eps=eps, out_dtype=x.dtype),
            out_shape=(jax.ShapeDtypeStruct((N, C, HW), x.dtype),
                       jax.ShapeDtypeStruct((C, 1), jnp.float32),
                       jax.ShapeDtypeStruct((C, 1), jnp.float32)),
            in_specs=[pl.BlockSpec(memory_space=pl.ANY),
                      pl.BlockSpec(memory_space=pltpu.MemorySpace.VMEM),
                      pl.BlockSpec(memory_space=pltpu.MemorySpace.VMEM)],
            out_specs=(pl.BlockSpec(memory_space=pl.ANY),
                       pl.BlockSpec(memory_space=pltpu.MemorySpace.VMEM),
                       pl.BlockSpec(memory_space=pltpu.MemorySpace.VMEM)),
            scratch_shapes=[pltpu.VMEM((N, C, HW), x.dtype)],
            compiler_params=pltpu.CompilerParams(**cparams),
        )(x3, g, b)
    else:
        # ---- tiled fallback: two pipelined passes over x ----
        tile_budget = vmem_limit // 6           # in+out double-buffered + slack
        nb, hw_t = _choose_tiles(N, C, HW, itemsize, tile_budget)
        n_nb, n_hw = N // nb, HW // hw_t
        lane_fold = (hw_t % 128 == 0)
        w_acc = 128 if lane_fold else hw_t

        x_spec = pl.BlockSpec((nb, C, hw_t), lambda i, t: (i, 0, t))
        acc_spec = pl.BlockSpec((None, C, w_acc), lambda i, t: (i, 0, 0))
        acc_shape = jax.ShapeDtypeStruct((n_nb, C, w_acc), jnp.float32)

        # Pass 1: per-N-block lane-wide partial sums; N axis "parallel" so the
        # stats pass shards across v7x's two TensorCores.
        sums, sumsqs = pl.pallas_call(
            functools.partial(_stats_kernel, lane_fold=lane_fold),
            out_shape=(acc_shape, acc_shape),
            grid=(n_nb, n_hw),
            in_specs=[x_spec],
            out_specs=(acc_spec, acc_spec),
            compiler_params=pltpu.CompilerParams(
                dimension_semantics=("parallel", "arbitrary"), **cparams),
        )(x3)

        # Tiny finalize on (C,1)-sized arrays in plain jnp.
        s = jnp.sum(sums, axis=(0, 2)).reshape(C, 1)
        ss = jnp.sum(sumsqs, axis=(0, 2)).reshape(C, 1)
        mean = s * inv_count
        var = ss * inv_count - mean * mean
        inv_std = lax.rsqrt(var + eps)
        scale = g * inv_std
        shift = b - mean * scale

        cvec_spec = pl.BlockSpec((C, 1), lambda i, t: (0, 0))

        # Pass 2: normalize.  Fully independent grid -> both axes "parallel".
        # (pipeline_mode=pl.Buffered(3) on x/y specs is a cheap knob to sweep
        #  if the interleaved read/write streams leave DMA latency exposed.)
        y3 = pl.pallas_call(
            _normalize_kernel,
            out_shape=jax.ShapeDtypeStruct((N, C, HW), x.dtype),
            grid=(n_nb, n_hw),
            in_specs=[cvec_spec, cvec_spec, x_spec],
            out_specs=x_spec,
            compiler_params=pltpu.CompilerParams(
                dimension_semantics=("parallel", "parallel"), **cparams),
        )(scale, shift, x3)

    # Moving-statistics update on tiny (C,1) arrays (kept out of the kernels).
    mean4 = mean.reshape(1, C, 1, 1)
    var4 = var.reshape(1, C, 1, 1)
    new_mm = momentum * moving_mean.astype(jnp.float32) + (1.0 - momentum) * mean4
    new_mv = momentum * moving_var.astype(jnp.float32) + (1.0 - momentum) * var4
    return y3.reshape(N, C, H, W), new_mm, new_mv


def _reference(x, gamma, beta, moving_mean, moving_var):
    x = x.astype(jnp.float32)
    mean = jnp.mean(x, axis=(0, 2, 3), keepdims=True)
    var = jnp.mean((x - mean) ** 2, axis=(0, 2, 3), keepdims=True)
    x_hat = (x - mean) / jnp.sqrt(var + EPS)
    y = gamma * x_hat + beta
    mm = MOMENTUM * moving_mean + (1.0 - MOMENTUM) * mean
    mv = MOMENTUM * moving_var + (1.0 - MOMENTUM) * var
    return y, mm, mv


if __name__ == "__main__":
    N, C, H, W = 2, 4, 16, 16

    key = jax.random.PRNGKey(0)
    x = jax.random.normal(key, (N, C, H, W), dtype=jnp.float32)

    # Deterministic parameter init, identical to the module's __init__.
    shape = (1, C, 1, 1)
    gamma = jnp.ones(shape, jnp.float32)
    beta = jnp.ones(shape, jnp.float32)
    moving_mean = jnp.ones(shape, jnp.float32)
    moving_var = jnp.ones(shape, jnp.float32)

    y_ref, mm_ref, mv_ref = _reference(x, gamma, beta, moving_mean, moving_var)

    # Fused (x-resident-in-VMEM) path — the one selected for this shape.
    y, new_mm, new_mv = batch_normal_pallas(x, gamma, beta, moving_mean, moving_var)
    jax.block_until_ready((y, new_mm, new_mv))
    assert jnp.allclose(y, y_ref, atol=1e-5, rtol=1e-5)
    assert jnp.allclose(new_mm, mm_ref, atol=1e-5, rtol=1e-5)
    assert jnp.allclose(new_mv, mv_ref, atol=1e-5, rtol=1e-5)

    # Tiled two-pass fallback (exercised explicitly so the large-x path is
    # validated on hardware as well).
    y2, mm2, mv2 = batch_normal_pallas(x, gamma, beta, moving_mean, moving_var,
                                       force_tiled=True)
    jax.block_until_ready((y2, mm2, mv2))
    assert jnp.allclose(y2, y_ref, atol=1e-5, rtol=1e-5)
    assert jnp.allclose(mm2, mm_ref, atol=1e-5, rtol=1e-5)
    assert jnp.allclose(mv2, mv_ref, atol=1e-5, rtol=1e-5)

    print("KERNEL_OK")
</pallas_src>

<mosaic_0001>
module attributes {stable_mosaic.version = 11 : i64} {
  func.func @_fused_bn_kernel(%arg0: memref<2x4x256xf32, #tpu.memory_space<any>>, %arg1: memref<4x1xf32, #tpu.memory_space<vmem>>, %arg2: memref<4x1xf32, #tpu.memory_space<vmem>>, %arg3: memref<2x4x256xf32, #tpu.memory_space<any>>, %arg4: memref<4x1xf32, #tpu.memory_space<vmem>>, %arg5: memref<4x1xf32, #tpu.memory_space<vmem>>, %arg6: memref<2x4x256xf32, #tpu.memory_space<vmem>>) attributes {dimension_semantics = [], scalar_prefetch = 0 : i64, scratch_operands = 1 : i64, tpu.core_type = #tpu.core_type<tc>} {
    "tpu.region"() ({
      %20 = tpu.sem_alloc : memref<!tpu.dma_semaphore, #tpu.memory_space<semaphore_mem>>
      tpu.enqueue_dma source(%arg0 : memref<2x4x256xf32, #tpu.memory_space<any>>) target(%arg6 : memref<2x4x256xf32, #tpu.memory_space<vmem>>) target_semaphore(%20 : memref<!tpu.dma_semaphore, #tpu.memory_space<semaphore_mem>>)
      tpu.wait_dma2 semaphore(%20 : memref<!tpu.dma_semaphore, #tpu.memory_space<semaphore_mem>>) src(%arg0 : memref<2x4x256xf32, #tpu.memory_space<any>>) dst(%arg6 : memref<2x4x256xf32, #tpu.memory_space<vmem>>)
      tpu.yield
    }) : () -> ()
    %cst = arith.constant 0.000000e+00 : f32
    %0 = vector.broadcast %cst : f32 to vector<4x1xf32>
    %c0_i32 = arith.constant 0 : i32
    %c2_i32 = arith.constant 2 : i32
    %1 = arith.addi %c0_i32, %c2_i32 : i32
    %c1_i32 = arith.constant 1 : i32
    %2:2 = scf.for %arg7 = %c0_i32 to %1 step %c1_i32 iter_args(%arg8 = %0, %arg9 = %0) -> (vector<4x1xf32>, vector<4x1xf32>)  : i32 {
      %20 = arith.index_cast %arg7 : i32 to index
      %c0_15 = arith.constant 0 : index
      %c0_16 = arith.constant 0 : index
      %21 = vector.load %arg6[%20, %c0_15, %c0_16] : memref<2x4x256xf32, #tpu.memory_space<vmem>>, vector<1x4x256xf32>
      %22 = vector.shape_cast %21 : vector<1x4x256xf32> to vector<4x256xf32>
      %cst_17 = arith.constant dense<0.000000e+00> : vector<4xf32>
      %23 = vector.multi_reduction <add>, %22, %cst_17 [1] : vector<4x256xf32> to vector<4xf32>
      %24 = vector.shape_cast %23 : vector<4xf32> to vector<4x1xf32>
      %25 = arith.addf %arg8, %24 : vector<4x1xf32>
      %26 = arith.mulf %22, %22 : vector<4x256xf32>
      %cst_18 = arith.constant dense<0.000000e+00> : vector<4xf32>
      %27 = vector.multi_reduction <add>, %26, %cst_18 [1] : vector<4x256xf32> to vector<4xf32>
      %28 = vector.shape_cast %27 : vector<4xf32> to vector<4x1xf32>
      %29 = arith.addf %arg9, %28 : vector<4x1xf32>
      scf.yield %25, %29 : vector<4x1xf32>, vector<4x1xf32>
    }
    %c2_i32_0 = arith.constant 2 : i32
    %cst_1 = arith.constant 0.001953125 : f32
    %3 = vector.broadcast %cst_1 : f32 to vector<4x1xf32>
    %4 = arith.mulf %2#0, %3 : vector<4x1xf32>
    %cst_2 = arith.constant 0.001953125 : f32
    %5 = vector.broadcast %cst_2 : f32 to vector<4x1xf32>
    %6 = arith.mulf %2#1, %5 : vector<4x1xf32>
    %7 = arith.mulf %4, %4 : vector<4x1xf32>
    %8 = arith.subf %6, %7 : vector<4x1xf32>
    %c0 = arith.constant 0 : index
    %c0_3 = arith.constant 0 : index
    %9 = vector.load %arg4[%c0, %c0_3] : memref<4x1xf32, #tpu.memory_space<vmem>>, vector<4x1xf32>
    tpu.vector_store %arg4[%c0, %c0_3], %4 {strides = array<i32>} : memref<4x1xf32, #tpu.memory_space<vmem>>, vector<4x1xf32>,
    %c0_4 = arith.constant 0 : index
    %c0_5 = arith.constant 0 : index
    %10 = vector.load %arg5[%c0_4, %c0_5] : memref<4x1xf32, #tpu.memory_space<vmem>>, vector<4x1xf32>
    tpu.vector_store %arg5[%c0_4, %c0_5], %8 {strides = array<i32>} : memref<4x1xf32, #tpu.memory_space<vmem>>, vector<4x1xf32>,
    %cst_6 = arith.constant 9.99999974E-6 : f32
    %11 = vector.broadcast %cst_6 : f32 to vector<4x1xf32>
    %12 = arith.addf %8, %11 : vector<4x1xf32>
    %13 = math.rsqrt %12 : vector<4x1xf32>
    %c0_7 = arith.constant 0 : index
    %c0_8 = arith.constant 0 : index
    %14 = vector.load %arg1[%c0_7, %c0_8] : memref<4x1xf32, #tpu.memory_space<vmem>>, vector<4x1xf32>
    %15 = arith.mulf %14, %13 : vector<4x1xf32>
    %c0_9 = arith.constant 0 : index
    %c0_10 = arith.constant 0 : index
    %16 = vector.load %arg2[%c0_9, %c0_10] : memref<4x1xf32, #tpu.memory_space<vmem>>, vector<4x1xf32>
    %17 = arith.mulf %4, %15 : vector<4x1xf32>
    %18 = arith.subf %16, %17 : vector<4x1xf32>
    %c0_i32_11 = arith.constant 0 : i32
    %c2_i32_12 = arith.constant 2 : i32
    %19 = arith.addi %c0_i32_11, %c2_i32_12 : i32
    %c1_i32_13 = arith.constant 1 : i32
    scf.for %arg7 = %c0_i32_11 to %19 step %c1_i32_13  : i32 {
      %20 = arith.index_cast %arg7 : i32 to index
      %c0_15 = arith.constant 0 : index
      %c0_16 = arith.constant 0 : index
      %21 = vector.load %arg6[%20, %c0_15, %c0_16] : memref<2x4x256xf32, #tpu.memory_space<vmem>>, vector<1x4x256xf32>
      %22 = vector.shape_cast %21 : vector<1x4x256xf32> to vector<4x256xf32>
      %23 = vector.broadcast %15 : vector<4x1xf32> to vector<4x256xf32>
      %24 = arith.mulf %22, %23 : vector<4x256xf32>
      %25 = vector.broadcast %18 : vector<4x1xf32> to vector<4x256xf32>
      %26 = arith.addf %24, %25 : vector<4x256xf32>
      %27 = arith.index_cast %arg7 : i32 to index
      %c0_17 = arith.constant 0 : index
      %c0_18 = arith.constant 0 : index
      %28 = vector.load %arg6[%27, %c0_17, %c0_18] : memref<2x4x256xf32, #tpu.memory_space<vmem>>, vector<1x4x256xf32>
      %29 = vector.shape_cast %28 : vector<1x4x256xf32> to vector<4x256xf32>
      %30 = vector.shape_cast %26 : vector<4x256xf32> to vector<1x4x256xf32>
      tpu.vector_store %arg6[%27, %c0_17, %c0_18], %30 {strides = array<i32>} : memref<2x4x256xf32, #tpu.memory_space<vmem>>, vector<1x4x256xf32>,
    }
    %c2_i32_14 = arith.constant 2 : i32
    "tpu.region"() ({
      %20 = tpu.sem_alloc : memref<!tpu.dma_semaphore, #tpu.memory_space<semaphore_mem>>
      tpu.enqueue_dma source(%arg6 : memref<2x4x256xf32, #tpu.memory_space<vmem>>) target(%arg3 : memref<2x4x256xf32, #tpu.memory_space<any>>) target_semaphore(%20 : memref<!tpu.dma_semaphore, #tpu.memory_space<semaphore_mem>>)
      tpu.wait_dma2 semaphore(%20 : memref<!tpu.dma_semaphore, #tpu.memory_space<semaphore_mem>>) src(%arg6 : memref<2x4x256xf32, #tpu.memory_space<vmem>>) dst(%arg3 : memref<2x4x256xf32, #tpu.memory_space<any>>)
      tpu.yield
    }) : () -> ()
    return
  }
}

</mosaic_0001>

<llo_original>
// kernel: tpu_custom_call.1
$region0: #{tpu_custom_call.1}
  #allocation0 [shape = 'u32[]', space=smem, size = 0x4, offset = 0x4, fixed_abs, tag = 'smem constant byte address 0x4 - core index']
  #allocation1 [shape = 'u32[72,128]{1,0:T(1,128)}', space=vmem, size = 0x9000, scoped, tag = 'internal scratch']
  #allocation2 [shape = 'f32[2,4,256]{2,1,0:T(4,128)}', space=vmem, size = 0x2000, scoped, tag = 'scratch operand']
  #allocation4 [shape = 's32[]', space=sflag, size = 0x4, offset = 0, fixed_abs, tag = 'sflag constant byte address 0x0 - dummy sync flag']
  #allocation5 [shape = 's32[]', space=sflag, size = 0x4, offset = 0, fixed_abs, tag = 'sflag constant byte address 0x0 - dummy sync flag']
  #allocation6 [shape = 'u32[]', space=smem, size = 0x4, offset = 0x44, fixed_abs, tag = 'smem constant byte address 0x44 - assertion arg 0']
  #allocation7 [shape = 'u32[]', space=smem, size = 0x4, offset = 0x48, fixed_abs, tag = 'smem constant byte address 0x48 - assertion arg 1']
  #allocation9 [shape = 's32[]', space=sflag, size = 0x4, offset = 0, fixed_abs, tag = 'sflag constant byte address 0x0 - dummy sync flag']
  #allocation10 [shape = 's32[]', space=sflag, size = 0x4, offset = 0, fixed_abs, tag = 'sflag constant byte address 0x0 - dummy sync flag']
  %s0 = inlined_call_operand.hbm [shape: f32[2,4,256], index: 0, kind: input, shape index: {}]
  %s1 = inlined_call_operand.vmem [shape: f32[4,1], index: 1, kind: input, shape index: {}]
  %s2 = inlined_call_operand.vmem [shape: f32[4,1], index: 2, kind: input, shape index: {}]
  %s3 = inlined_call_operand.hbm [shape: f32[2,4,256], index: 3, kind: output, shape index: {0}]
  %s4 = inlined_call_operand.vmem [shape: f32[4,1], index: 4, kind: output, shape index: {1}]
  %s5 = inlined_call_operand.vmem [shape: f32[4,1], index: 5, kind: output, shape index: {2}]
  %6 = xla_tuple %s3, %s4, %s5
  %s7 = sld [smem:[#allocation0]]
  $region50: #{tpu_custom_call.1} parent=0
    _
  %s9 = ssub.s32 1, %s7
  %s10 = scalar_select 0, %s9, %s7
  // Predicated region
  $region2: #{tpu_custom_call.1} parent=0 // pred_check
    _
  $region3: #{tpu_custom_call.1} parent=0 // pred_check_branch
    %12 = sbr.rel (0) target = $region5
  $region4: #{tpu_custom_call.1} parent=0 // pred_region
    _
  $region5: #{tpu_custom_call.1} parent=0 // pred_fallthru
    _
  // Predicated region
  $region6: #{tpu_custom_call.1} parent=0 // pred_check
    _
  $region7: #{tpu_custom_call.1} parent=0 // pred_check_branch
    %14 = sbr.rel (0) target = $region9
  $region8: #{tpu_custom_call.1} parent=0 // pred_region
    _
  $region9: #{tpu_custom_call.1} parent=0 // pred_fallthru
    _
  $region10: #{tpu_custom_call.1} parent=0
    #allocation3 [shape = 's32[1]{0}', space=sflag, size = 0x4, scoped, tag = 'scoped memory for tpu_custom_call.1']
    // Predicated region
    $region11: #{tpu_custom_call.1} parent=10 // pred_check
      _
    $region12: #{tpu_custom_call.1} parent=10 // pred_check_branch
      %16 = sbr.rel target = $region14
    $region13: #{tpu_custom_call.1} parent=10 // pred_region
      %17 = sst [smem:[#allocation6]] [#allocation5]
      %18 = sst [smem:[#allocation7]] [#allocation4]
    $region14: #{tpu_custom_call.1} parent=10 // pred_fallthru
      _
    %20 = shalt.err (0)
    %s22 = sshll.u32 %s0, 4
    %s23 = int_to_ptr.hbm [resolvable:$true] %s22
    %s24 = sshll.u32 [#allocation2], 4
    %s25 = int_to_ptr.vmem [resolvable:$true] %s24
    %27 = dma.hbm_to_vmem [thread:$0]  %s23, 256, %s25, [#allocation3]
    %s28 = smul.u32 4, 2
    %s29 = smul.u32 %s28, 1
    %s30 = smul.u32 %s29, 2
    %s31 = sshll.u32 %s30, 4
    %32 = dma.done [#allocation3], %s31
  loop: start=0, step=1, limit=2
  $region15: #{tpu_custom_call.1} parent=0 // loop_pre_header
    _
  $region16: #{tpu_custom_call.1} parent=0 // loop_header
    %s34 = sphi 0, %s38
    %p35 = scmp.ge.s32.totalorder %s34, 2
    %v39 = vphi 0.0, %v57
    %v40 = vphi 0.0, %v70
  $region17: #{tpu_custom_call.1} parent=0 // loop_header_branch
    %37 = sbr.rel (%p35) target = $region21
  $region18: #{tpu_custom_call.1} parent=0 // loop_body
    %s41 = smul.u32 %s34, 2
    %s42 = smul.addr %s41, 4
    %s43 = scalar_lea.vmem [#allocation2], %s42
    %v44 = vld [vmem:[%s43] sm:$0xff]
    %46 = vst [vmem:[#allocation1] ss:$2 sm:$0xff] %v44
    %v47 = vld.sshfl [vmem:[#allocation1] sm:$0xff pattern:$0x75316420]
    %v48 = vld.sshfl [vmem:[#allocation1 + $0x8] sm:$0xff pattern:$0x75316420]
    %vm51 = vcmask 1043456
    %v52 = vsel %vm51, %v47, 0.0
    %v53 = vsel %vm51, %v48, 0.0
    %v54 = vadd.f32 %v52, %v53
    %55 = vadd.xlane.f32.xlu0 %v54
    %v56 = vpop.xlane.xlu0 %55
    %v57 = vadd.f32 %v39, %v56
    %v58 = vmul.f32 %v44, %v44
    %60 = vst [vmem:[#allocation1] ss:$2 sm:$0xff] %v58
    %v61 = vld.sshfl [vmem:[#allocation1] sm:$0xff pattern:$0x75316420]
    %v62 = vld.sshfl [vmem:[#allocation1 + $0x8] sm:$0xff pattern:$0x75316420]
    %v65 = vsel %vm51, %v61, 0.0
    %v66 = vsel %vm51, %v62, 0.0
    %v67 = vadd.f32 %v65, %v66
    %68 = vadd.xlane.f32.xlu0 %v67
    %v69 = vpop.xlane.xlu0 %68
    %v70 = vadd.f32 %v40, %v69
  $region19: #{tpu_custom_call.1} parent=0 // loop_footer
    %s38 = sadd.s32 1, %s34
  $region20: #{tpu_custom_call.1} parent=0 // loop_footer_branch
    %33 = sbr.rel target = $region16
  $region21: #{tpu_custom_call.1} parent=0 // loop_exit
    _
  %v71 = vmul.f32 %v39, 0.001953125
  %v72 = vmul.f32 %v40, 0.001953125
  %v73 = vmul.f32 %v71, %v71
  %v74 = vsub.f32 %v72, %v73
  %vm75 = vcmask 3072
  %76 = vst.msk [vmem:[%s4] sm:$0xf] %vm75, %v71
  %77 = vst.msk [vmem:[%s5] sm:$0xf] %vm75, %v74
  %v78 = vadd.f32 %v74, 1e-05
  %v79 = vrsqrt.pop %v78
  %v80 = vmul.f32 %v79, %v78
  %v81 = vmul.f32 %v80, %v79
  %v82 = vmul.f32 0.5, %v81
  %v83 = vsub.f32 1.5, %v82
  %v84 = vmul.f32 %v79, %v83
  %vm85 = vweird.f32 %v78
  %vm86 = vweird.f32 %v79
  %vm87 = vmor %vm85, %vm86
  %v88 = vsel %vm87, %v79, %v84
  %v89 = vld [vmem:[%s1] sm:$0xf]
  %v90 = vmul.f32 %v89, %v88
  %v91 = vld [vmem:[%s2] sm:$0xf]
  %v92 = vmul.f32 %v71, %v90
  %v93 = vsub.f32 %v91, %v92
  loop: start=0, step=1, limit=2
  $region22: #{tpu_custom_call.1} parent=0 // loop_pre_header
    _
  $region23: #{tpu_custom_call.1} parent=0 // loop_header
    %s95 = sphi 0, %s99
    %p96 = scmp.ge.s32.totalorder %s95, 2
  $region24: #{tpu_custom_call.1} parent=0 // loop_header_branch
    %98 = sbr.rel (%p96) target = $region28
  $region25: #{tpu_custom_call.1} parent=0 // loop_body
    %s100 = smul.u32 %s95, 2
    %s101 = smul.addr %s100, 4
    %s102 = scalar_lea.vmem [#allocation2], %s101
    %v103 = vld [vmem:[%s102] sm:$0xff]
    %105 = vset.pattern.permute.xlu0 0
    %106 = vperm.xlu0 %105, %v90
    %v107 = vpop.permute.xlu0 %106
    %v109 = vunpack.c.l.s4 839922192
    %v110 = vunpack.c.0.s8 %v109
    %v111 = vperm.slane %v107, %v110
    %v113 = vmul.f32 %v103, %v111
    %115 = vset.pattern.permute.xlu0 0
    %116 = vperm.xlu0 %115, %v93
    %v117 = vpop.permute.xlu0 %116
    %v119 = vunpack.c.l.s4 839922192
    %v120 = vunpack.c.0.s8 %v119
    %v121 = vperm.slane %v117, %v120
    %v123 = vadd.f32 %v113, %v121
    %124 = vst [vmem:[%s102] sm:$0xff] %v123
  $region26: #{tpu_custom_call.1} parent=0 // loop_footer
    %s99 = sadd.s32 1, %s95
  $region27: #{tpu_custom_call.1} parent=0 // loop_footer_branch
    %94 = sbr.rel target = $region23
  $region28: #{tpu_custom_call.1} parent=0 // loop_exit
    _
  $region29: #{tpu_custom_call.1} parent=0
    #allocation8 [shape = 's32[1]{0}', space=sflag, size = 0x4, scoped, tag = 'scoped memory for tpu_custom_call.1']
    // Predicated region
    $region30: #{tpu_custom_call.1} parent=29 // pred_check
      _
    $region31: #{tpu_custom_call.1} parent=29 // pred_check_branch
      %126 = sbr.rel target = $region33
    $region32: #{tpu_custom_call.1} parent=29 // pred_region
      %127 = sst [smem:[#allocation6]] [#allocation10]
      %128 = sst [smem:[#allocation7]] [#allocation9]
    $region33: #{tpu_custom_call.1} parent=29 // pred_fallthru
      _
    %130 = shalt.err (0)
    %s132 = sshll.u32 [#allocation2], 4
    %s133 = int_to_ptr.vmem [resolvable:$true] %s132
    %s134 = sshll.u32 %s3, 4
    %s135 = int_to_ptr.hbm [resolvable:$true] %s134
    %137 = dma.vmem_to_hbm [thread:$0]  %s133, 256, %s135, [#allocation8]
    %s138 = smul.u32 4, 2
    %s139 = smul.u32 %s138, 1
    %s140 = smul.u32 %s139, 2
    %s141 = sshll.u32 %s140, 4
    %142 = dma.done [#allocation8], %s141
  // Predicated region
  $region34: #{tpu_custom_call.1} parent=0 // pred_check
    _
  $region35: #{tpu_custom_call.1} parent=0 // pred_check_branch
    %144 = sbr.rel (0) target = $region37
  $region36: #{tpu_custom_call.1} parent=0 // pred_region
    _
  $region37: #{tpu_custom_call.1} parent=0 // pred_fallthru
    _
  // Predicated region
  $region38: #{tpu_custom_call.1} parent=0 // pred_check
    _
  $region39: #{tpu_custom_call.1} parent=0 // pred_check_branch
    %146 = sbr.rel (0) target = $region41
  $region40: #{tpu_custom_call.1} parent=0 // pred_region
    _
  $region41: #{tpu_custom_call.1} parent=0 // pred_fallthru
    _
  // Predicated region
  $region42: #{tpu_custom_call.1} parent=0 // pred_check
    _
  $region43: #{tpu_custom_call.1} parent=0 // pred_check_branch
    %148 = sbr.rel (0) target = $region45
  $region44: #{tpu_custom_call.1} parent=0 // pred_region
    _
  $region45: #{tpu_custom_call.1} parent=0 // pred_fallthru
    _
  // Predicated region
  $region46: #{tpu_custom_call.1} parent=0 // pred_check
    _
  $region47: #{tpu_custom_call.1} parent=0 // pred_check_branch
    %150 = sbr.rel (0) target = $region49
  $region48: #{tpu_custom_call.1} parent=0 // pred_region
    _
  $region49: #{tpu_custom_call.1} parent=0 // pred_fallthru
    _

</llo_original>
